<compile_context>
chip_gen: v5e
topology: v5e:2x2
jax: 0.10.0
libtpu: 0.0.40
codegen_flags: <defaults>
</compile_context>

<pallas_src>
import functools

import jax
import jax.numpy as jnp
import numpy as np
from jax import lax
from jax.experimental import pallas as pl
from jax.experimental.pallas import tpu as pltpu


def _dense_layer_kernel(w_ref, b_ref, m_ref, x_ref, o_ref, *,
                        c_in, c_out, width, patch_dtype):
    """One grid step == b_tile whole images, lane-dense.

    w_ref: VMEM (c_out, 9*c_in)  flattened 3x3 weight (tap-major, ci-minor), patch_dtype
    b_ref: VMEM (c_out, 1)       conv bias, f32
    m_ref: VMEM (9, L)           per-tap 'same'-padding border masks (tiled over b_tile), f32
    x_ref: VMEM (c_in, L)        input block, L = b_tile * Hp*Wp (lane dense)
    o_ref: VMEM (c_in+c_out, L)  output block: rows [0,c_in) passthrough, rest = relu(conv)
    """
    x = x_ref[...]                                    # single load, reused below
    o_ref[0:c_in, :] = x.astype(o_ref.dtype)          # concat passthrough channels

    xf = x.astype(jnp.float32)
    masks = m_ref[...]                                # (9, L) f32
    lanes = xf.shape[1]

    # Batched im2col: each 3x3 tap is the whole lane-dense block rotated by the
    # flattened source offset (XLU roll), with out-of-image source pixels
    # zeroed by a precomputed border mask.  Rolling across image/padding
    # boundaries inside the block is harmless: exactly those pixels are the
    # masked ones, so no per-image loop and no zero-padded scratch image.
    taps = []
    for di in range(3):
        for dj in range(3):
            t = di * 3 + dj
            s = (di - 1) * width + (dj - 1)           # flattened source offset
            shifted = xf if s == 0 else pltpu.roll(xf, shift=(-s) % lanes, axis=1)
            if not (di == 1 and dj == 1):             # center tap: in-image mask is all ones
                shifted = shifted * masks[t:t + 1, :]
            taps.append(shifted.astype(patch_dtype))  # bf16 patch; mask math stays f32

    patch = jnp.concatenate(taps, axis=0)             # (9*c_in, L) matmul RHS (no scratch)

    # Single MXU matmul does the whole channel/tap contraction for all b_tile
    # images at once; accumulate in f32, then bias + ReLU.
    y = jnp.dot(w_ref[...], patch, preferred_element_type=jnp.float32)
    y = jnp.maximum(y + b_ref[...], 0.0)
    o_ref[c_in:c_in + c_out, :] = y.astype(o_ref.dtype)


def _pick_b_tile(n, per_image_bytes, target_bytes=4 * 1024 * 1024):
    """Largest divisor of n whose per-step block stays under target, grid >= 2."""
    best = 1
    for bt in range(1, n + 1):
        if n % bt:
            continue
        if n >= 2 and n // bt < 2:        # keep >= 2 grid steps (v7x 2-core balance)
            continue
        if bt * per_image_bytes > target_bytes:
            continue
        best = bt
    return best


def dense_layer(x, weight, bias, *, b_tile=None, patch_dtype=jnp.bfloat16):
    """Pallas TPU DenseLayer forward.

    x:      (N, C_in, H, W)
    weight: (C_out, C_in, 3, 3)   (PyTorch OIHW)
    bias:   (C_out,)
    returns (N, C_in + C_out, H, W) = concat([x, relu(conv3x3(x) + bias)], 1)
    """
    n, c_in, h, w = x.shape
    c_out = weight.shape[0]
    assert weight.shape == (c_out, c_in, 3, 3)
    p = h * w
    p_pad = ((p + 127) // 128) * 128      # lane-dense spatial length per image

    itemsize = x.dtype.itemsize
    patch_itemsize = jnp.dtype(patch_dtype).itemsize
    per_image_bytes = p_pad * (
        2 * c_in * itemsize                       # double-buffered input block
        + 2 * (c_in + c_out) * itemsize           # double-buffered output block
        + 9 * c_in * (patch_itemsize + 4)         # patch RHS + f32 tap intermediates
        + 9 * 4)                                  # border masks

    if b_tile is None:
        b_tile = _pick_b_tile(n, per_image_bytes)
    assert n % b_tile == 0, "batch must be divisible by b_tile"
    lanes = b_tile * p_pad

    # --- host-side layout plumbing (lane-dense channel-major 2-D slabs) -----
    x_flat = x.reshape(n, c_in, p)
    if p_pad != p:
        x_flat = jnp.pad(x_flat, ((0, 0), (0, 0), (0, p_pad - p)))
    x2d = jnp.transpose(x_flat, (1, 0, 2)).reshape(c_in, n * p_pad)

    # Flatten the weight to (C_out, 9*C_in) with column k = (di*3+dj)*C_in+ci,
    # matching the patch row order built in the kernel.  bf16 matmul operand.
    w_flat = jnp.transpose(weight, (0, 2, 3, 1)).reshape(c_out, 9 * c_in)
    w_flat = w_flat.astype(patch_dtype)
    b_col = bias.reshape(c_out, 1).astype(jnp.float32)

    # Per-tap validity masks for the 'same' (pad=1) conv; padding columns are
    # zero in every tap.  Tiled across the b_tile images of one block.
    hh, ww = np.meshgrid(np.arange(h), np.arange(w), indexing="ij")
    masks = np.zeros((9, p_pad), np.float32)
    for di in range(3):
        for dj in range(3):
            ok = ((hh + di - 1 >= 0) & (hh + di - 1 < h) &
                  (ww + dj - 1 >= 0) & (ww + dj - 1 < w))
            masks[di * 3 + dj, :p] = ok.reshape(p).astype(np.float32)
    masks = jnp.asarray(np.tile(masks, (1, b_tile)))          # (9, lanes)

    # VMEM budget derived from the actual blocks; capped for v7x's 64 MiB VMEM.
    est = b_tile * per_image_bytes + (2 << 20)
    vmem_limit = int(min(max(est, 32 << 20), 48 << 20))

    kernel = functools.partial(_dense_layer_kernel, c_in=c_in, c_out=c_out,
                               width=w, patch_dtype=patch_dtype)

    out2d = pl.pallas_call(
        kernel,
        out_shape=jax.ShapeDtypeStruct((c_in + c_out, n * p_pad), x.dtype),
        grid_spec=pltpu.PrefetchScalarGridSpec(
            num_scalar_prefetch=0,
            grid=(n // b_tile,),
            in_specs=[
                # tiny conv weight / bias / masks: whole-array VMEM constants
                pl.BlockSpec((c_out, 9 * c_in), lambda i: (0, 0)),
                pl.BlockSpec((c_out, 1), lambda i: (0, 0)),
                pl.BlockSpec((9, lanes), lambda i: (0, 0)),
                # b_tile images per grid step, lane-dense 2-D column block
                pl.BlockSpec((c_in, lanes), lambda i: (0, i)),
            ],
            out_specs=pl.BlockSpec((c_in + c_out, lanes), lambda i: (0, i)),
        ),
        compiler_params=pltpu.CompilerParams(
            dimension_semantics=("parallel",),
            vmem_limit_bytes=vmem_limit,
        ),
    )(w_flat, b_col, masks, x2d)

    out = out2d.reshape(c_in + c_out, n, p_pad)[:, :, :p]
    out = jnp.transpose(out, (1, 0, 2)).reshape(n, c_in + c_out, h, w)
    return out


def dense_layer_ref(x, weight, bias):
    """Pure-JAX reference mirroring the PyTorch forward."""
    conv = lax.conv_general_dilated(
        x, weight, window_strides=(1, 1), padding="SAME",
        dimension_numbers=("NCHW", "OIHW", "NCHW"),
        precision=lax.Precision.HIGHEST)
    conv = conv + bias.reshape(1, -1, 1, 1)
    return jnp.concatenate([x, jnp.maximum(conv, 0.0)], axis=1)


if __name__ == "__main__":
    key = jax.random.PRNGKey(0)
    kx, kw, kb = jax.random.split(key, 3)

    # Small demo shapes: DenseLayer(in_channels=8, out_channels=8).
    N, C_IN, C_OUT, H, W = 8, 8, 8, 16, 16

    x = jax.random.normal(kx, (N, C_IN, H, W), dtype=jnp.float32)
    fan_in = C_IN * 3 * 3
    weight = jax.random.normal(kw, (C_OUT, C_IN, 3, 3), dtype=jnp.float32)
    weight = weight / float(np.sqrt(fan_in))
    bias = 0.1 * jax.random.normal(kb, (C_OUT,), dtype=jnp.float32)

    out = dense_layer(x, weight, bias)          # b_tile auto -> 4 images/step, grid=(2,)
    out = jax.block_until_ready(out)

    ref = dense_layer_ref(x, weight, bias)
    # bf16 matmul operands (f32 accumulation) vs HIGHEST-precision lax.conv:
    # worst-case per-output error is a few 1e-3; 2e-2 leaves ample margin while
    # still catching any structural (O(0.1)) error.
    np.testing.assert_allclose(np.asarray(out), np.asarray(ref),
                               rtol=2e-2, atol=2e-2)
    print("KERNEL_OK")
</pallas_src>

<mosaic_0001>
module attributes {stable_mosaic.version = 11 : i64} {
  func.func @_dense_layer_kernel(%arg0: i32, %arg1: memref<8x72xbf16, #tpu.memory_space<vmem>>, %arg2: memref<8x1xf32, #tpu.memory_space<vmem>>, %arg3: memref<9x1024xf32, #tpu.memory_space<vmem>>, %arg4: memref<8x1024xf32, #tpu.memory_space<vmem>>, %arg5: memref<16x1024xf32, #tpu.memory_space<vmem>>) attributes {dimension_semantics = [#tpu.dimension_semantics<parallel>], iteration_bounds = array<i64: 2>, scalar_prefetch = 0 : i64, scratch_operands = 0 : i64, tpu.core_type = #tpu.core_type<tc>, window_params = [{pipeline_mode = #tpu.pipeline_mode<synchronous>, transform_indices = @transform_0, window_bounds = array<i64: 8, 72>}, {pipeline_mode = #tpu.pipeline_mode<synchronous>, transform_indices = @transform_1, window_bounds = array<i64: 8, 1>}, {pipeline_mode = #tpu.pipeline_mode<synchronous>, transform_indices = @transform_2, window_bounds = array<i64: 9, 1024>}, {transform_indices = @transform_3, window_bounds = array<i64: 8, 1024>}, {transform_indices = @transform_4, window_bounds = array<i64: 16, 1024>}]} {
    %c0 = arith.constant 0 : index
    %c0_0 = arith.constant 0 : index
    %0 = vector.load %arg4[%c0, %c0_0] : memref<8x1024xf32, #tpu.memory_space<vmem>>, vector<8x1024xf32>
    %c0_1 = arith.constant 0 : index
    %c0_2 = arith.constant 0 : index
    %1 = vector.load %arg5[%c0_1, %c0_2] : memref<16x1024xf32, #tpu.memory_space<vmem>>, vector<8x1024xf32>
    tpu.vector_store %arg5[%c0_1, %c0_2], %0 {strides = array<i32>} : memref<16x1024xf32, #tpu.memory_space<vmem>>, vector<8x1024xf32>,
    %c0_3 = arith.constant 0 : index
    %c0_4 = arith.constant 0 : index
    %2 = vector.load %arg3[%c0_3, %c0_4] : memref<9x1024xf32, #tpu.memory_space<vmem>>, vector<9x1024xf32>
    %c17_i32 = arith.constant 17 : i32
    %3 = tpu.dynamic_rotate %0 by %c17_i32 dim 1 : vector<8x1024xf32>, i32 -> vector<8x1024xf32>
    %4 = vector.extract_strided_slice %2 {offsets = [0, 0], sizes = [1, 1024], strides = [1, 1]} : vector<9x1024xf32> to vector<1x1024xf32>
    %5 = vector.broadcast %4 : vector<1x1024xf32> to vector<8x1024xf32>
    %6 = arith.mulf %3, %5 : vector<8x1024xf32>
    %7 = arith.truncf %6 : vector<8x1024xf32> to vector<8x1024xbf16>
    %c16_i32 = arith.constant 16 : i32
    %8 = tpu.dynamic_rotate %0 by %c16_i32 dim 1 : vector<8x1024xf32>, i32 -> vector<8x1024xf32>
    %9 = vector.extract_strided_slice %2 {offsets = [1, 0], sizes = [1, 1024], strides = [1, 1]} : vector<9x1024xf32> to vector<1x1024xf32>
    %10 = vector.broadcast %9 : vector<1x1024xf32> to vector<8x1024xf32>
    %11 = arith.mulf %8, %10 : vector<8x1024xf32>
    %12 = arith.truncf %11 : vector<8x1024xf32> to vector<8x1024xbf16>
    %c15_i32 = arith.constant 15 : i32
    %13 = tpu.dynamic_rotate %0 by %c15_i32 dim 1 : vector<8x1024xf32>, i32 -> vector<8x1024xf32>
    %14 = vector.extract_strided_slice %2 {offsets = [2, 0], sizes = [1, 1024], strides = [1, 1]} : vector<9x1024xf32> to vector<1x1024xf32>
    %15 = vector.broadcast %14 : vector<1x1024xf32> to vector<8x1024xf32>
    %16 = arith.mulf %13, %15 : vector<8x1024xf32>
    %17 = arith.truncf %16 : vector<8x1024xf32> to vector<8x1024xbf16>
    %c1_i32 = arith.constant 1 : i32
    %18 = tpu.dynamic_rotate %0 by %c1_i32 dim 1 : vector<8x1024xf32>, i32 -> vector<8x1024xf32>
    %19 = vector.extract_strided_slice %2 {offsets = [3, 0], sizes = [1, 1024], strides = [1, 1]} : vector<9x1024xf32> to vector<1x1024xf32>
    %20 = vector.broadcast %19 : vector<1x1024xf32> to vector<8x1024xf32>
    %21 = arith.mulf %18, %20 : vector<8x1024xf32>
    %22 = arith.truncf %21 : vector<8x1024xf32> to vector<8x1024xbf16>
    %23 = arith.truncf %0 : vector<8x1024xf32> to vector<8x1024xbf16>
    %c1023_i32 = arith.constant 1023 : i32
    %24 = tpu.dynamic_rotate %0 by %c1023_i32 dim 1 : vector<8x1024xf32>, i32 -> vector<8x1024xf32>
    %25 = vector.extract_strided_slice %2 {offsets = [5, 0], sizes = [1, 1024], strides = [1, 1]} : vector<9x1024xf32> to vector<1x1024xf32>
    %26 = vector.broadcast %25 : vector<1x1024xf32> to vector<8x1024xf32>
    %27 = arith.mulf %24, %26 : vector<8x1024xf32>
    %28 = arith.truncf %27 : vector<8x1024xf32> to vector<8x1024xbf16>
    %c1009_i32 = arith.constant 1009 : i32
    %29 = tpu.dynamic_rotate %0 by %c1009_i32 dim 1 : vector<8x1024xf32>, i32 -> vector<8x1024xf32>
    %30 = vector.extract_strided_slice %2 {offsets = [6, 0], sizes = [1, 1024], strides = [1, 1]} : vector<9x1024xf32> to vector<1x1024xf32>
    %31 = vector.broadcast %30 : vector<1x1024xf32> to vector<8x1024xf32>
    %32 = arith.mulf %29, %31 : vector<8x1024xf32>
    %33 = arith.truncf %32 : vector<8x1024xf32> to vector<8x1024xbf16>
    %c1008_i32 = arith.constant 1008 : i32
    %34 = tpu.dynamic_rotate %0 by %c1008_i32 dim 1 : vector<8x1024xf32>, i32 -> vector<8x1024xf32>
    %35 = vector.extract_strided_slice %2 {offsets = [7, 0], sizes = [1, 1024], strides = [1, 1]} : vector<9x1024xf32> to vector<1x1024xf32>
    %36 = vector.broadcast %35 : vector<1x1024xf32> to vector<8x1024xf32>
    %37 = arith.mulf %34, %36 : vector<8x1024xf32>
    %38 = arith.truncf %37 : vector<8x1024xf32> to vector<8x1024xbf16>
    %c1007_i32 = arith.constant 1007 : i32
    %39 = tpu.dynamic_rotate %0 by %c1007_i32 dim 1 : vector<8x1024xf32>, i32 -> vector<8x1024xf32>
    %40 = vector.extract_strided_slice %2 {offsets = [8, 0], sizes = [1, 1024], strides = [1, 1]} : vector<9x1024xf32> to vector<1x1024xf32>
    %41 = vector.broadcast %40 : vector<1x1024xf32> to vector<8x1024xf32>
    %42 = arith.mulf %39, %41 : vector<8x1024xf32>
    %43 = arith.truncf %42 : vector<8x1024xf32> to vector<8x1024xbf16>
    %44 = tpu.concatenate %7, %12, %17, %22, %23, %28, %33, %38, %43 in 0 : vector<8x1024xbf16>, vector<8x1024xbf16>, vector<8x1024xbf16>, vector<8x1024xbf16>, vector<8x1024xbf16>, vector<8x1024xbf16>, vector<8x1024xbf16>, vector<8x1024xbf16>, vector<8x1024xbf16> -> vector<72x1024xbf16>
    %c0_5 = arith.constant 0 : index
    %c0_6 = arith.constant 0 : index
    %45 = vector.load %arg1[%c0_5, %c0_6] : memref<8x72xbf16, #tpu.memory_space<vmem>>, vector<8x72xbf16>
    %cst = arith.constant dense<0.000000e+00> : vector<8x1024xf32>
    %46 = tpu.matmul %45, %44, %cst {dimension_numbers = #tpu.dot_dimension_numbers<[1], [0], [0], [1], [0, 0, 1, 1], [], []>} : vector<8x72xbf16>, vector<72x1024xbf16>, vector<8x1024xf32> -> vector<8x1024xf32>
    %c0_7 = arith.constant 0 : index
    %c0_8 = arith.constant 0 : index
    %47 = vector.load %arg2[%c0_7, %c0_8] : memref<8x1xf32, #tpu.memory_space<vmem>>, vector<8x1xf32>
    %48 = vector.broadcast %47 : vector<8x1xf32> to vector<8x1024xf32>
    %49 = arith.addf %46, %48 : vector<8x1024xf32>
    %cst_9 = arith.constant 0.000000e+00 : f32
    %50 = vector.broadcast %cst_9 : f32 to vector<8x1024xf32>
    %51 = arith.maximumf %49, %50 : vector<8x1024xf32>
    %c8 = arith.constant 8 : index
    %c0_10 = arith.constant 0 : index
    %52 = vector.load %arg5[%c8, %c0_10] : memref<16x1024xf32, #tpu.memory_space<vmem>>, vector<8x1024xf32>
    tpu.vector_store %arg5[%c8, %c0_10], %51 {strides = array<i32>} : memref<16x1024xf32, #tpu.memory_space<vmem>>, vector<8x1024xf32>,
    return
  }
  func.func @transform_0(%arg0: i32) -> (i32, i32) {
    %c0_i32 = arith.constant 0 : i32
    %c0_i32_0 = arith.constant 0 : i32
    %c0_i32_1 = arith.constant 0 : i32
    return %c0_i32, %c0_i32_0 : i32, i32
  }
  func.func @transform_1(%arg0: i32) -> (i32, i32) {
    %c0_i32 = arith.constant 0 : i32
    %c0_i32_0 = arith.constant 0 : i32
    %c0_i32_1 = arith.constant 0 : i32
    return %c0_i32, %c0_i32_0 : i32, i32
  }
  func.func @transform_2(%arg0: i32) -> (i32, i32) {
    %c0_i32 = arith.constant 0 : i32
    %c0_i32_0 = arith.constant 0 : i32
    %c0_i32_1 = arith.constant 0 : i32
    return %c0_i32, %c0_i32_0 : i32, i32
  }
  func.func @transform_3(%arg0: i32) -> (i32, i32) {
    %c0_i32 = arith.constant 0 : i32
    %c0_i32_0 = arith.constant 0 : i32
    return %c0_i32, %arg0 : i32, i32
  }
  func.func @transform_4(%arg0: i32) -> (i32, i32) {
    %c0_i32 = arith.constant 0 : i32
    %c0_i32_0 = arith.constant 0 : i32
    return %c0_i32, %arg0 : i32, i32
  }
}

</mosaic_0001>

<llo_original>
// kernel: tpu_custom_call.1
$region0: #{tpu_custom_call.1}
  #allocation0 [shape = 'u32[]', space=smem, size = 0x4, offset = 0x4, fixed_abs, tag = 'smem constant byte address 0x4 - core index']
  #allocation1 [shape = 'u32[72,128]{1,0:T(1,128)}', space=vmem, size = 0x9000, scoped, tag = 'internal scratch']
  %s0 = inlined_call_operand.vmem [shape: bf16[8,72], index: 0, kind: input, shape index: {}]
  %s1 = inlined_call_operand.vmem [shape: f32[8,1], index: 1, kind: input, shape index: {}]
  %s2 = inlined_call_operand.hbm [shape: f32[9,1024], index: 2, kind: input, shape index: {}]
  %s3 = inlined_call_operand.hbm [shape: f32[8,2048], index: 3, kind: input, shape index: {}]
  %s4 = inlined_call_operand.hbm [shape: f32[16,2048], index: 4, kind: output, shape index: {}]
  %s5 = sld [smem:[#allocation0]]
  $region57: #{tpu_custom_call.1} parent=0
    _
  %s7 = ssub.s32 1, %s5
  %s8 = scalar_select 0, %s7, %s5
  $region1: #{tpu_custom_call.1} parent=0
    #allocation2 [shape = 'u8[65536]{0}', space=vmem, size = 0x10000, scoped, tag = 'input window, operand 2, single buffered']
    #allocation3 [shape = 's32[2]{0}', space=sflag, size = 0x8, scoped, tag = 'scoped memory for tpu_custom_call.1']
    #allocation4 [shape = 's32[2]{0}', space=sflag, size = 0x8, scoped, tag = 'scoped memory for tpu_custom_call.1']
    #allocation5 [shape = 'u8[65536]{0}', space=vmem, size = 0x10000, scoped, tag = 'input window, operand 3']
    #allocation6 [shape = 's32[2]{0}', space=sflag, size = 0x8, scoped, tag = 'scoped memory for tpu_custom_call.1']
    #allocation7 [shape = 'u8[131072]{0}', space=vmem, size = 0x20000, scoped, tag = 'output window, operand 0']
    %9 = vsyncpa [#allocation3], 0
    %10 = vsyncpa [#allocation6], 0
    %s11 = scalar_lea.sflag [#allocation6], 1
    %12 = vsyncpa %s11, 0
    %13 = vsyncpa [#allocation4], 0
    %s14 = scalar_lea.sflag [#allocation4], 1
    %15 = vsyncpa %s14, 0
    loop: start=0, step=1, limit=4
    $region2: #{tpu_custom_call.1} parent=1 // loop_pre_header
      _
    $region3: #{tpu_custom_call.1} parent=1 // loop_header
      %s17 = sphi 0, %s21
      %p18 = scmp.ge.s32.totalorder %s17, 4
      %s25 = sphi 0, %s25
      %s27 = sphi 0, %s25
      %s28 = sphi 0, %s27
      %s42 = sphi 0, %s28
      %s46 = sphi 0, %s46
      %s48 = sphi 0, %s46
      %s49 = sphi 0, %s48
      %s63 = sphi 0, %s49
      %s67 = sphi 0, %s67
      %s69 = sphi 0, %s67
      %s70 = sphi 0, %s69
      %s84 = sphi 0, %s70
      %s90 = sphi 0, %s92
      %s93 = sphi 0, %s90
      %s94 = sphi 0, %s93
      %s110 = sphi 0, %s94
      %s116 = sphi 0, %s118
      %s119 = sphi 0, %s116
      %s120 = sphi 0, %s119
      %s136 = sphi 0, %s120
    $region4: #{tpu_custom_call.1} parent=1 // loop_header_branch
      %20 = sbr.rel (%p18) target = $region8
    $region5: #{tpu_custom_call.1} parent=1 // loop_body
      %s22 = ssub.s32 %s17, 1
      %s23 = ssub.s32 %s17, 2
      %s24 = sadd.s32 %s17, 1
      %s26 = sadd.s32 %s25, 1
      %p29 = scmp.eq.s32.totalorder %s17, 1
      %p30 = scmp.ne.s32.totalorder %s25, %s27
      %p31 = scmp.eq.s32.totalorder %s17, 0
      %p32 = por %p30, %p31
      %p33 = scmp.ne.s32.totalorder %s25, %s27
      %p34 = scmp.eq.s32.totalorder %s22, 1
      %p35 = por %p33, %p34
      %p36 = scmp.ne.s32.totalorder %s27, %s28
      %p37 = scmp.eq.s32.totalorder %s22, 0
      %p38 = por %p36, %p37
      %p39 = scmp.ne.s32.totalorder %s27, %s28
      %p40 = scmp.eq.s32.totalorder %s23, 1
      %p41 = por %p39, %p40
      %p43 = scmp.ne.s32.totalorder %s28, %s42
      %p44 = scmp.eq.s32.totalorder %s23, 0
      %p45 = por %p43, %p44
      %s47 = sadd.s32 %s46, 1
      %p50 = scmp.eq.s32.totalorder %s17, 1
      %p51 = scmp.ne.s32.totalorder %s46, %s48
      %p52 = scmp.eq.s32.totalorder %s17, 0
      %p53 = por %p51, %p52
      %p54 = scmp.ne.s32.totalorder %s46, %s48
      %p55 = scmp.eq.s32.totalorder %s22, 1
      %p56 = por %p54, %p55
      %p57 = scmp.ne.s32.totalorder %s48, %s49
      %p58 = scmp.eq.s32.totalorder %s22, 0
      %p59 = por %p57, %p58
      %p60 = scmp.ne.s32.totalorder %s48, %s49
      %p61 = scmp.eq.s32.totalorder %s23, 1
      %p62 = por %p60, %p61
      %p64 = scmp.ne.s32.totalorder %s49, %s63
      %p65 = scmp.eq.s32.totalorder %s23, 0
      %p66 = por %p64, %p65
      %s68 = sadd.s32 %s67, 1
      %p71 = scmp.eq.s32.totalorder %s17, 1
      %p72 = scmp.ne.s32.totalorder %s67, %s69
      %p73 = scmp.eq.s32.totalorder %s17, 0
      %p74 = por %p72, %p73
      %p75 = scmp.ne.s32.totalorder %s67, %s69
      %p76 = scmp.eq.s32.totalorder %s22, 1
      %p77 = por %p75, %p76
      %p78 = scmp.ne.s32.totalorder %s69, %s70
      %p79 = scmp.eq.s32.totalorder %s22, 0
      %p80 = por %p78, %p79
      %p81 = scmp.ne.s32.totalorder %s69, %s70
      %p82 = scmp.eq.s32.totalorder %s23, 1
      %p83 = por %p81, %p82
      %p85 = scmp.ne.s32.totalorder %s70, %s84
      %p86 = scmp.eq.s32.totalorder %s23, 0
      %p87 = por %p85, %p86
      %s88 = ssub.s32 %s17, %s24
      %p89 = scmp.eq.s32.totalorder %s88, 0
      %s91 = sadd.s32 %s90, 1
      %s92 = scalar_select %p89, %s90, %s91
      %p95 = pneg %p89
      %p96 = scmp.eq.s32.totalorder %s17, 1
      %p97 = por %p95, %p96
      %p98 = scmp.ne.s32.totalorder %s90, %s93
      %p99 = scmp.eq.s32.totalorder %s17, 0
      %p100 = por %p98, %p99
      %p101 = scmp.ne.s32.totalorder %s90, %s93
      %p102 = scmp.eq.s32.totalorder %s22, 1
      %p103 = por %p101, %p102
      %p104 = scmp.ne.s32.totalorder %s93, %s94
      %p105 = scmp.eq.s32.totalorder %s22, 0
      %p106 = por %p104, %p105
      %p107 = scmp.ne.s32.totalorder %s93, %s94
      %p108 = scmp.eq.s32.totalorder %s23, 1
      %p109 = por %p107, %p108
      %p111 = scmp.ne.s32.totalorder %s94, %s110
      %p112 = scmp.eq.s32.totalorder %s23, 0
      %p113 = por %p111, %p112
      %s114 = ssub.s32 %s17, %s24
      %p115 = scmp.eq.s32.totalorder %s114, 0
      %s117 = sadd.s32 %s116, 1
      %s118 = scalar_select %p115, %s116, %s117
      %p121 = pneg %p115
      %p122 = scmp.eq.s32.totalorder %s17, 1
      %p123 = por %p121, %p122
      %p124 = scmp.ne.s32.totalorder %s116, %s119
      %p125 = scmp.eq.s32.totalorder %s17, 0
      %p126 = por %p124, %p125
      %p127 = scmp.ne.s32.totalorder %s116, %s119
      %p128 = scmp.eq.s32.totalorder %s22, 1
      %p129 = por %p127, %p128
      %p130 = scmp.ne.s32.totalorder %s119, %s120
      %p131 = scmp.eq.s32.totalorder %s22, 0
      %p132 = por %p130, %p131
      %p133 = scmp.ne.s32.totalorder %s119, %s120
      %p134 = scmp.eq.s32.totalorder %s23, 1
      %p135 = por %p133, %p134
      %p137 = scmp.ne.s32.totalorder %s120, %s136
      %p138 = scmp.eq.s32.totalorder %s23, 0
      %p139 = por %p137, %p138
      %p140 = scmp.le.s32.totalorder 1, %s17
      %p141 = scmp.lt.s32.totalorder %s17, 3
      %p142 = pnand %p140, %p141
      %p143 = pneg %p142
      // Predicated region
      $region9: #{tpu_custom_call.1} parent=5 // pred_check
        _
      $region10: #{tpu_custom_call.1} parent=5 // pred_check_branch
        %145 = sbr.rel (%p142) target = $region12
      $region11: #{tpu_custom_call.1} parent=5 // pred_region
        %s146 = ssub.s32 %s17, 1
        // Predicated region
        $region13: #{tpu_custom_call.1} parent=11 // pred_check
          %p147 = pneg %p38
        $region14: #{tpu_custom_call.1} parent=11 // pred_check_branch
          %149 = sbr.rel (%p147) target = $region16
        $region15: #{tpu_custom_call.1} parent=11 // pred_region
          _
        $region16: #{tpu_custom_call.1} parent=11 // pred_fallthru
          _
        // Predicated region
        $region17: #{tpu_custom_call.1} parent=11 // pred_check
          %p150 = pneg %p59
        $region18: #{tpu_custom_call.1} parent=11 // pred_check_branch
          %152 = sbr.rel (%p150) target = $region20
        $region19: #{tpu_custom_call.1} parent=11 // pred_region
          _
        $region20: #{tpu_custom_call.1} parent=11 // pred_fallthru
          _
        // Predicated region
        $region21: #{tpu_custom_call.1} parent=11 // pred_check
          %p153 = pneg %p80
        $region22: #{tpu_custom_call.1} parent=11 // pred_check_branch
          %155 = sbr.rel (%p153) target = $region24
        $region23: #{tpu_custom_call.1} parent=11 // pred_region
          %157 = vsyncadd [#allocation3], 0
          %s158 = sshll.u32 %s2, 4
          %s159 = int_to_ptr.hbm [resolvable:$true] %s158
          %s160 = sshll.u32 [#allocation2], 4
          %s161 = int_to_ptr.vmem [resolvable:$true] %s160
          %166 = dma.hbm_to_vmem [thread:$0]  %s159, 2048, %s161, [#allocation3], 1024, 1024, 64
        $region24: #{tpu_custom_call.1} parent=11 // pred_fallthru
          _
      $region12: #{tpu_custom_call.1} parent=5 // pred_fallthru
        _
      %p167 = scmp.lt.s32.totalorder %s17, 2
      // Predicated region
      $region25: #{tpu_custom_call.1} parent=5 // pred_check
        %p168 = pneg %p167
      $region26: #{tpu_custom_call.1} parent=5 // pred_check_branch
        %170 = sbr.rel (%p168) target = $region28
      $region27: #{tpu_custom_call.1} parent=5 // pred_region
        // Predicated region
        $region29: #{tpu_custom_call.1} parent=27 // pred_check
          %p171 = pneg %p100
        $region30: #{tpu_custom_call.1} parent=27 // pred_check_branch
          %173 = sbr.rel (%p171) target = $region32
        $region31: #{tpu_custom_call.1} parent=27 // pred_region
          %s174 = sand.u32 %s90, 1
          %s175 = scalar_lea.sflag [#allocation6], %s174
          %s176 = sand.u32 %s90, 1
          %s177 = smul.addr %s176, 64
          %s178 = scalar_lea.vmem [#allocation5], %s177
          %s179 = smul.u32 8, %s17
          %181 = vsyncadd %s175, 0
          %s182 = smul.addr %s179, 8
          %s183 = scalar_lea.hbm %s3, %s182
          %s185 = sshll.u32 %s183, 4
          %s186 = int_to_ptr.hbm [resolvable:$true] %s185
          %s187 = sshll.u32 %s178, 4
          %s188 = int_to_ptr.vmem [resolvable:$true] %s187
          %190 = dma.hbm_to_vmem [thread:$0]  %s186, 1024, %s188, %s175
        $region32: #{tpu_custom_call.1} parent=27 // pred_fallthru
          _
      $region28: #{tpu_custom_call.1} parent=5 // pred_fallthru
        _
      %p191 = scmp.le.s32.totalorder 1, %s17
      %p192 = scmp.lt.s32.totalorder %s17, 3
      %p193 = pnand %p191, %p192
      %p194 = pneg %p193
      // Predicated region
      $region33: #{tpu_custom_call.1} parent=5 // pred_check
        _
      $region34: #{tpu_custom_call.1} parent=5 // pred_check_branch
        %196 = sbr.rel (%p193) target = $region36
      $region35: #{tpu_custom_call.1} parent=5 // pred_region
        %s197 = ssub.s32 %s17, 1
        // Predicated region
        $region37: #{tpu_custom_call.1} parent=35 // pred_check
          %p198 = pneg %p80
        $region38: #{tpu_custom_call.1} parent=35 // pred_check_branch
          %200 = sbr.rel (%p198) target = $region40
        $region39: #{tpu_custom_call.1} parent=35 // pred_region
          %202 = dma.done [#allocation3], 2048
        $region40: #{tpu_custom_call.1} parent=35 // pred_fallthru
          _
        %s203 = sand.u32 %s93, 1
        %s204 = scalar_lea.sflag [#allocation6], %s203
        %s205 = sand.u32 %s93, 1
        %s206 = smul.addr %s205, 64
        %s207 = scalar_lea.vmem [#allocation5], %s206
        // Predicated region
        $region41: #{tpu_custom_call.1} parent=35 // pred_check
          %p208 = pneg %p106
        $region42: #{tpu_custom_call.1} parent=35 // pred_check_branch
          %210 = sbr.rel (%p208) target = $region44
        $region43: #{tpu_custom_call.1} parent=35 // pred_region
          %212 = dma.done %s204, 1024
        $region44: #{tpu_custom_call.1} parent=35 // pred_fallthru
          _
        %p213 = pneg %p38
        %p214 = pneg %p35
        %p215 = pneg %p59
        %p216 = pneg %p56
        %p217 = pneg %p80
        %p218 = pneg %p77
        %s219 = sand.u32 %s93, 1
        %s220 = scalar_lea.sflag [#allocation6], %s219
        %s221 = sand.u32 %s93, 1
        %s222 = smul.addr %s221, 64
        %s223 = scalar_lea.vmem [#allocation5], %s222
        %p224 = pneg %p106
        %p225 = pneg %p103
        %p226 = pneg %p132
        %p227 = pneg %p129
        %s228 = sand.u32 %s119, 1
        %s229 = scalar_lea.sflag [#allocation4], %s228
        %s230 = sand.u32 %s119, 1
        %s231 = smul.addr %s230, 128
        %s232 = scalar_lea.vmem [#allocation7], %s231
        %s233 = smul.u32 8, %s22
        %s234 = smul.u32 8, %s22
        %v236 = vld [vmem:[%s207] sm:$0xff]
        %v237 = vld [vmem:[%s207 + $0x8] sm:$0xff]
        %v238 = vld [vmem:[%s207 + $0x10] sm:$0xff]
        %v239 = vld [vmem:[%s207 + $0x18] sm:$0xff]
        %v240 = vld [vmem:[%s207 + $0x20] sm:$0xff]
        %v241 = vld [vmem:[%s207 + $0x28] sm:$0xff]
        %v242 = vld [vmem:[%s207 + $0x30] sm:$0xff]
        %v243 = vld [vmem:[%s207 + $0x38] sm:$0xff]
        %244 = vst [vmem:[%s232] sm:$0xff] %v236
        %245 = vst [vmem:[%s232 + $0x8] sm:$0xff] %v237
        %246 = vst [vmem:[%s232 + $0x10] sm:$0xff] %v238
        %247 = vst [vmem:[%s232 + $0x18] sm:$0xff] %v239
        %248 = vst [vmem:[%s232 + $0x20] sm:$0xff] %v240
        %249 = vst [vmem:[%s232 + $0x28] sm:$0xff] %v241
        %250 = vst [vmem:[%s232 + $0x30] sm:$0xff] %v242
        %251 = vst [vmem:[%s232 + $0x38] sm:$0xff] %v243
        %v252 = vld [vmem:[#allocation2] sm:$0xff]
        %v253 = vld [vmem:[#allocation2 + $0x8] sm:$0xff]
        %v254 = vld [vmem:[#allocation2 + $0x10] sm:$0xff]
        %v255 = vld [vmem:[#allocation2 + $0x18] sm:$0xff]
        %v256 = vld [vmem:[#allocation2 + $0x20] sm:$0xff]
        %v257 = vld [vmem:[#allocation2 + $0x28] sm:$0xff]
        %v258 = vld [vmem:[#allocation2 + $0x30] sm:$0xff]
        %v259 = vld [vmem:[#allocation2 + $0x38] sm:$0xff]
        %v260 = vld [vmem:[#allocation2 + $0x40] sm:$0x1]
        %v261 = vld [vmem:[#allocation2 + $0x48] sm:$0x1]
        %v262 = vld [vmem:[#allocation2 + $0x50] sm:$0x1]
        %v263 = vld [vmem:[#allocation2 + $0x58] sm:$0x1]
        %v264 = vld [vmem:[#allocation2 + $0x60] sm:$0x1]
        %v265 = vld [vmem:[#allocation2 + $0x68] sm:$0x1]
        %v266 = vld [vmem:[#allocation2 + $0x70] sm:$0x1]
        %v267 = vld [vmem:[#allocation2 + $0x78] sm:$0x1]
        %268 = vrot.lane.b32.xlu0 %v236, 17
        %v269 = vpop.permute.xlu0 %268
        %270 = vrot.lane.b32.xlu0 %v237, 17
        %v271 = vpop.permute.xlu0 %270
        %272 = vrot.lane.b32.xlu0 %v238, 17
        %v273 = vpop.permute.xlu0 %272
        %274 = vrot.lane.b32.xlu0 %v239, 17
        %v275 = vpop.permute.xlu0 %274
        %276 = vrot.lane.b32.xlu0 %v240, 17
        %v277 = vpop.permute.xlu0 %276
        %278 = vrot.lane.b32.xlu0 %v241, 17
        %v279 = vpop.permute.xlu0 %278
        %280 = vrot.lane.b32.xlu0 %v242, 17
        %v281 = vpop.permute.xlu0 %280
        %282 = vrot.lane.b32.xlu0 %v243, 17
        %v283 = vpop.permute.xlu0 %282
        %v284 = vlaneseq
        %v285 = vand.u32 %v284, 127
        %vm286 = vcmp.lt.s32.totalorder %v285, 17
        %v287 = vsel %vm286, %v281, %v283
        %v288 = vsel %vm286, %v279, %v281
        %v289 = vsel %vm286, %v277, %v279
        %v290 = vsel %vm286, %v275, %v277
        %v291 = vsel %vm286, %v273, %v275
        %v292 = vsel %vm286, %v271, %v273
        %v293 = vsel %vm286, %v269, %v271
        %v294 = vsel %vm286, %v283, %v269
        %v295 = vperm.slane %v252, 0
        %v296 = vperm.slane %v253, 0
        %v297 = vperm.slane %v254, 0
        %v298 = vperm.slane %v255, 0
        %v299 = vperm.slane %v256, 0
        %v300 = vperm.slane %v257, 0
        %v301 = vperm.slane %v258, 0
        %v302 = vperm.slane %v259, 0
        %v303 = vmul.f32 %v294, %v295
        %v304 = vmul.f32 %v293, %v296
        %v305 = vmul.f32 %v292, %v297
        %v306 = vmul.f32 %v291, %v298
        %v307 = vmul.f32 %v290, %v299
        %v308 = vmul.f32 %v289, %v300
        %v309 = vmul.f32 %v288, %v301
        %v310 = vmul.f32 %v287, %v302
        %v311 = vpack.c.bf16 %v304, %v303
        %v312 = vpack.c.bf16 %v306, %v305
        %v313 = vpack.c.bf16 %v308, %v307
        %v314 = vpack.c.bf16 %v310, %v309
        %315 = vrot.lane.b32.xlu0 %v236, 16
        %v316 = vpop.permute.xlu0 %315
        %317 = vrot.lane.b32.xlu0 %v237, 16
        %v318 = vpop.permute.xlu0 %317
        %319 = vrot.lane.b32.xlu0 %v238, 16
        %v320 = vpop.permute.xlu0 %319
        %321 = vrot.lane.b32.xlu0 %v239, 16
        %v322 = vpop.permute.xlu0 %321
        %323 = vrot.lane.b32.xlu0 %v240, 16
        %v324 = vpop.permute.xlu0 %323
        %325 = vrot.lane.b32.xlu0 %v241, 16
        %v326 = vpop.permute.xlu0 %325
        %327 = vrot.lane.b32.xlu0 %v242, 16
        %v328 = vpop.permute.xlu0 %327
        %329 = vrot.lane.b32.xlu0 %v243, 16
        %v330 = vpop.permute.xlu0 %329
        %vm331 = vcmp.lt.s32.totalorder %v285, 16
        %v332 = vsel %vm331, %v328, %v330
        %v333 = vsel %vm331, %v326, %v328
        %v334 = vsel %vm331, %v324, %v326
        %v335 = vsel %vm331, %v322, %v324
        %v336 = vsel %vm331, %v320, %v322
        %v337 = vsel %vm331, %v318, %v320
        %v338 = vsel %vm331, %v316, %v318
        %v339 = vsel %vm331, %v330, %v316
        %v340 = vperm.slane %v252, 1
        %v341 = vperm.slane %v253, 1
        %v342 = vperm.slane %v254, 1
        %v343 = vperm.slane %v255, 1
        %v344 = vperm.slane %v256, 1
        %v345 = vperm.slane %v257, 1
        %v346 = vperm.slane %v258, 1
        %v347 = vperm.slane %v259, 1
        %v348 = vmul.f32 %v339, %v340
        %v349 = vmul.f32 %v338, %v341
        %v350 = vmul.f32 %v337, %v342
        %v351 = vmul.f32 %v336, %v343
        %v352 = vmul.f32 %v335, %v344
        %v353 = vmul.f32 %v334, %v345
        %v354 = vmul.f32 %v333, %v346
        %v355 = vmul.f32 %v332, %v347
        %v356 = vpack.c.bf16 %v349, %v348
        %v357 = vpack.c.bf16 %v351, %v350
        %v358 = vpack.c.bf16 %v353, %v352
        %v359 = vpack.c.bf16 %v355, %v354
        %360 = vrot.lane.b32.xlu0 %v236, 15
        %v361 = vpop.permute.xlu0 %360
        %362 = vrot.lane.b32.xlu0 %v237, 15
        %v363 = vpop.permute.xlu0 %362
        %364 = vrot.lane.b32.xlu0 %v238, 15
        %v365 = vpop.permute.xlu0 %364
        %366 = vrot.lane.b32.xlu0 %v239, 15
        %v367 = vpop.permute.xlu0 %366
        %368 = vrot.lane.b32.xlu0 %v240, 15
        %v369 = vpop.permute.xlu0 %368
        %370 = vrot.lane.b32.xlu0 %v241, 15
        %v371 = vpop.permute.xlu0 %370
        %372 = vrot.lane.b32.xlu0 %v242, 15
        %v373 = vpop.permute.xlu0 %372
        %374 = vrot.lane.b32.xlu0 %v243, 15
        %v375 = vpop.permute.xlu0 %374
        %vm376 = vcmp.lt.s32.totalorder %v285, 15
        %v377 = vsel %vm376, %v373, %v375
        %v378 = vsel %vm376, %v371, %v373
        %v379 = vsel %vm376, %v369, %v371
        %v380 = vsel %vm376, %v367, %v369
        %v381 = vsel %vm376, %v365, %v367
        %v382 = vsel %vm376, %v363, %v365
        %v383 = vsel %vm376, %v361, %v363
        %v384 = vsel %vm376, %v375, %v361
        %v385 = vperm.slane %v252, 2
        %v386 = vperm.slane %v253, 2
        %v387 = vperm.slane %v254, 2
        %v388 = vperm.slane %v255, 2
        %v389 = vperm.slane %v256, 2
        %v390 = vperm.slane %v257, 2
        %v391 = vperm.slane %v258, 2
        %v392 = vperm.slane %v259, 2
        %v393 = vmul.f32 %v384, %v385
        %v394 = vmul.f32 %v383, %v386
        %v395 = vmul.f32 %v382, %v387
        %v396 = vmul.f32 %v381, %v388
        %v397 = vmul.f32 %v380, %v389
        %v398 = vmul.f32 %v379, %v390
        %v399 = vmul.f32 %v378, %v391
        %v400 = vmul.f32 %v377, %v392
        %v401 = vpack.c.bf16 %v394, %v393
        %v402 = vpack.c.bf16 %v396, %v395
        %v403 = vpack.c.bf16 %v398, %v397
        %v404 = vpack.c.bf16 %v400, %v399
        %405 = vrot.lane.b32.xlu0 %v236, 1
        %v406 = vpop.permute.xlu0 %405
        %407 = vrot.lane.b32.xlu0 %v237, 1
        %v408 = vpop.permute.xlu0 %407
        %409 = vrot.lane.b32.xlu0 %v238, 1
        %v410 = vpop.permute.xlu0 %409
        %411 = vrot.lane.b32.xlu0 %v239, 1
        %v412 = vpop.permute.xlu0 %411
        %413 = vrot.lane.b32.xlu0 %v240, 1
        %v414 = vpop.permute.xlu0 %413
        %415 = vrot.lane.b32.xlu0 %v241, 1
        %v416 = vpop.permute.xlu0 %415
        %417 = vrot.lane.b32.xlu0 %v242, 1
        %v418 = vpop.permute.xlu0 %417
        %419 = vrot.lane.b32.xlu0 %v243, 1
        %v420 = vpop.permute.xlu0 %419
        %vm421 = vcmp.lt.s32.totalorder %v285, 1
        %v422 = vsel %vm421, %v418, %v420
        %v423 = vsel %vm421, %v416, %v418
        %v424 = vsel %vm421, %v414, %v416
        %v425 = vsel %vm421, %v412, %v414
        %v426 = vsel %vm421, %v410, %v412
        %v427 = vsel %vm421, %v408, %v410
        %v428 = vsel %vm421, %v406, %v408
        %v429 = vsel %vm421, %v420, %v406
        %v430 = vperm.slane %v252, 3
        %v431 = vperm.slane %v253, 3
        %v432 = vperm.slane %v254, 3
        %v433 = vperm.slane %v255, 3
        %v434 = vperm.slane %v256, 3
        %v435 = vperm.slane %v257, 3
        %v436 = vperm.slane %v258, 3
        %v437 = vperm.slane %v259, 3
        %v438 = vmul.f32 %v429, %v430
        %v439 = vmul.f32 %v428, %v431
        %v440 = vmul.f32 %v427, %v432
        %v441 = vmul.f32 %v426, %v433
        %v442 = vmul.f32 %v425, %v434
        %v443 = vmul.f32 %v424, %v435
        %v444 = vmul.f32 %v423, %v436
        %v445 = vmul.f32 %v422, %v437
        %v446 = vpack.c.bf16 %v439, %v438
        %v447 = vpack.c.bf16 %v441, %v440
        %v448 = vpack.c.bf16 %v443, %v442
        %v449 = vpack.c.bf16 %v445, %v444
        %v450 = vpack.c.bf16 %v237, %v236
        %v451 = vpack.c.bf16 %v239, %v238
        %v452 = vpack.c.bf16 %v241, %v240
        %v453 = vpack.c.bf16 %v243, %v242
        %454 = vrot.lane.b32.xlu0 %v236, 127
        %v455 = vpop.permute.xlu0 %454
        %456 = vrot.lane.b32.xlu0 %v237, 127
        %v457 = vpop.permute.xlu0 %456
        %458 = vrot.lane.b32.xlu0 %v238, 127
        %v459 = vpop.permute.xlu0 %458
        %460 = vrot.lane.b32.xlu0 %v239, 127
        %v461 = vpop.permute.xlu0 %460
        %462 = vrot.lane.b32.xlu0 %v240, 127
        %v463 = vpop.permute.xlu0 %462
        %464 = vrot.lane.b32.xlu0 %v241, 127
        %v465 = vpop.permute.xlu0 %464
        %466 = vrot.lane.b32.xlu0 %v242, 127
        %v467 = vpop.permute.xlu0 %466
        %468 = vrot.lane.b32.xlu0 %v243, 127
        %v469 = vpop.permute.xlu0 %468
        %vm470 = vcmp.lt.s32.totalorder %v285, 127
        %v471 = vsel %vm470, %v467, %v469
        %v472 = vsel %vm470, %v465, %v467
        %v473 = vsel %vm470, %v463, %v465
        %v474 = vsel %vm470, %v461, %v463
        %v475 = vsel %vm470, %v459, %v461
        %v476 = vsel %vm470, %v457, %v459
        %v477 = vsel %vm470, %v455, %v457
        %v478 = vsel %vm470, %v469, %v455
        %v479 = vperm.slane %v252, 5
        %v480 = vperm.slane %v253, 5
        %v481 = vperm.slane %v254, 5
        %v482 = vperm.slane %v255, 5
        %v483 = vperm.slane %v256, 5
        %v484 = vperm.slane %v257, 5
        %v485 = vperm.slane %v258, 5
        %v486 = vperm.slane %v259, 5
        %v487 = vmul.f32 %v477, %v479
        %v488 = vmul.f32 %v476, %v480
        %v489 = vmul.f32 %v475, %v481
        %v490 = vmul.f32 %v474, %v482
        %v491 = vmul.f32 %v473, %v483
        %v492 = vmul.f32 %v472, %v484
        %v493 = vmul.f32 %v471, %v485
        %v494 = vmul.f32 %v478, %v486
        %v495 = vpack.c.bf16 %v488, %v487
        %v496 = vpack.c.bf16 %v490, %v489
        %v497 = vpack.c.bf16 %v492, %v491
        %v498 = vpack.c.bf16 %v494, %v493
        %499 = vrot.lane.b32.xlu0 %v236, 113
        %v500 = vpop.permute.xlu0 %499
        %501 = vrot.lane.b32.xlu0 %v237, 113
        %v502 = vpop.permute.xlu0 %501
        %503 = vrot.lane.b32.xlu0 %v238, 113
        %v504 = vpop.permute.xlu0 %503
        %505 = vrot.lane.b32.xlu0 %v239, 113
        %v506 = vpop.permute.xlu0 %505
        %507 = vrot.lane.b32.xlu0 %v240, 113
        %v508 = vpop.permute.xlu0 %507
        %509 = vrot.lane.b32.xlu0 %v241, 113
        %v510 = vpop.permute.xlu0 %509
        %511 = vrot.lane.b32.xlu0 %v242, 113
        %v512 = vpop.permute.xlu0 %511
        %513 = vrot.lane.b32.xlu0 %v243, 113
        %v514 = vpop.permute.xlu0 %513
        %vm515 = vcmp.lt.s32.totalorder %v285, 113
        %v516 = vsel %vm515, %v512, %v514
        %v517 = vsel %vm515, %v510, %v512
        %v518 = vsel %vm515, %v508, %v510
        %v519 = vsel %vm515, %v506, %v508
        %v520 = vsel %vm515, %v504, %v506
        %v521 = vsel %vm515, %v502, %v504
        %v522 = vsel %vm515, %v500, %v502
        %v523 = vsel %vm515, %v514, %v500
        %v524 = vperm.slane %v252, 6
        %v525 = vperm.slane %v253, 6
        %v526 = vperm.slane %v254, 6
        %v527 = vperm.slane %v255, 6
        %v528 = vperm.slane %v256, 6
        %v529 = vperm.slane %v257, 6
        %v530 = vperm.slane %v258, 6
        %v531 = vperm.slane %v259, 6
        %v532 = vmul.f32 %v522, %v524
        %v533 = vmul.f32 %v521, %v525
        %v534 = vmul.f32 %v520, %v526
        %v535 = vmul.f32 %v519, %v527
        %v536 = vmul.f32 %v518, %v528
        %v537 = vmul.f32 %v517, %v529
        %v538 = vmul.f32 %v516, %v530
        %v539 = vmul.f32 %v523, %v531
        %v540 = vpack.c.bf16 %v533, %v532
        %v541 = vpack.c.bf16 %v535, %v534
        %v542 = vpack.c.bf16 %v537, %v536
        %v543 = vpack.c.bf16 %v539, %v538
        %544 = vrot.lane.b32.xlu0 %v236, 112
        %v545 = vpop.permute.xlu0 %544
        %546 = vrot.lane.b32.xlu0 %v237, 112
        %v547 = vpop.permute.xlu0 %546
        %548 = vrot.lane.b32.xlu0 %v238, 112
        %v549 = vpop.permute.xlu0 %548
        %550 = vrot.lane.b32.xlu0 %v239, 112
        %v551 = vpop.permute.xlu0 %550
        %552 = vrot.lane.b32.xlu0 %v240, 112
        %v553 = vpop.permute.xlu0 %552
        %554 = vrot.lane.b32.xlu0 %v241, 112
        %v555 = vpop.permute.xlu0 %554
        %556 = vrot.lane.b32.xlu0 %v242, 112
        %v557 = vpop.permute.xlu0 %556
        %558 = vrot.lane.b32.xlu0 %v243, 112
        %v559 = vpop.permute.xlu0 %558
        %vm560 = vcmp.lt.s32.totalorder %v285, 112
        %v561 = vsel %vm560, %v557, %v559
        %v562 = vsel %vm560, %v555, %v557
        %v563 = vsel %vm560, %v553, %v555
        %v564 = vsel %vm560, %v551, %v553
        %v565 = vsel %vm560, %v549, %v551
        %v566 = vsel %vm560, %v547, %v549
        %v567 = vsel %vm560, %v545, %v547
        %v568 = vsel %vm560, %v559, %v545
        %v569 = vperm.slane %v252, 7
        %v570 = vperm.slane %v253, 7
        %v571 = vperm.slane %v254, 7
        %v572 = vperm.slane %v255, 7
        %v573 = vperm.slane %v256, 7
        %v574 = vperm.slane %v257, 7
        %v575 = vperm.slane %v258, 7
        %v576 = vperm.slane %v259, 7
        %v577 = vmul.f32 %v567, %v569
        %v578 = vmul.f32 %v566, %v570
        %v579 = vmul.f32 %v565, %v571
        %v580 = vmul.f32 %v564, %v572
        %v581 = vmul.f32 %v563, %v573
        %v582 = vmul.f32 %v562, %v574
        %v583 = vmul.f32 %v561, %v575
        %v584 = vmul.f32 %v568, %v576
        %v585 = vpack.c.bf16 %v578, %v577
        %v586 = vpack.c.bf16 %v580, %v579
        %v587 = vpack.c.bf16 %v582, %v581
        %v588 = vpack.c.bf16 %v584, %v583
        %589 = vrot.lane.b32.xlu0 %v236, 111
        %v590 = vpop.permute.xlu0 %589
        %591 = vrot.lane.b32.xlu0 %v237, 111
        %v592 = vpop.permute.xlu0 %591
        %593 = vrot.lane.b32.xlu0 %v238, 111
        %v594 = vpop.permute.xlu0 %593
        %595 = vrot.lane.b32.xlu0 %v239, 111
        %v596 = vpop.permute.xlu0 %595
        %597 = vrot.lane.b32.xlu0 %v240, 111
        %v598 = vpop.permute.xlu0 %597
        %599 = vrot.lane.b32.xlu0 %v241, 111
        %v600 = vpop.permute.xlu0 %599
        %601 = vrot.lane.b32.xlu0 %v242, 111
        %v602 = vpop.permute.xlu0 %601
        %603 = vrot.lane.b32.xlu0 %v243, 111
        %v604 = vpop.permute.xlu0 %603
        %vm605 = vcmp.lt.s32.totalorder %v285, 111
        %v606 = vsel %vm605, %v602, %v604
        %v607 = vsel %vm605, %v600, %v602
        %v608 = vsel %vm605, %v598, %v600
        %v609 = vsel %vm605, %v596, %v598
        %v610 = vsel %vm605, %v594, %v596
        %v611 = vsel %vm605, %v592, %v594
        %v612 = vsel %vm605, %v590, %v592
        %v613 = vsel %vm605, %v604, %v590
        %v614 = vperm.slane %v260, 0
        %v615 = vperm.slane %v261, 0
        %v616 = vperm.slane %v262, 0
        %v617 = vperm.slane %v263, 0
        %v618 = vperm.slane %v264, 0
        %v619 = vperm.slane %v265, 0
        %v620 = vperm.slane %v266, 0
        %v621 = vperm.slane %v267, 0
        %v622 = vmul.f32 %v612, %v614
        %v623 = vmul.f32 %v611, %v615
        %v624 = vmul.f32 %v610, %v616
        %v625 = vmul.f32 %v609, %v617
        %v626 = vmul.f32 %v608, %v618
        %v627 = vmul.f32 %v607, %v619
        %v628 = vmul.f32 %v606, %v620
        %v629 = vmul.f32 %v613, %v621
        %v630 = vpack.c.bf16 %v623, %v622
        %v631 = vpack.c.bf16 %v625, %v624
        %v632 = vpack.c.bf16 %v627, %v626
        %v633 = vpack.c.bf16 %v629, %v628
        %v638 = vunpack.c.l.b16 %v311
        %v639 = vunpack.c.h.b16 %v311
        %v640 = vunpack.c.l.b16 %v312
        %v641 = vunpack.c.h.b16 %v312
        %v642 = vunpack.c.l.b16 %v313
        %v643 = vunpack.c.h.b16 %v313
        %v644 = vunpack.c.l.b16 %v314
        %v645 = vunpack.c.h.b16 %v314
        %v646 = vpack.c.b16 %v638, %v638
        %v647 = vpack.c.b16 %v639, %v639
        %v648 = vpack.c.b16 %v640, %v640
        %v649 = vpack.c.b16 %v641, %v641
        %v650 = vpack.c.b16 %v642, %v642
        %v651 = vpack.c.b16 %v643, %v643
        %v652 = vpack.c.b16 %v644, %v644
        %v653 = vpack.c.b16 %v645, %v645
        %v658 = vunpack.c.l.b16 %v356
        %v659 = vunpack.c.h.b16 %v356
        %v660 = vunpack.c.l.b16 %v357
        %v661 = vunpack.c.h.b16 %v357
        %v662 = vunpack.c.l.b16 %v358
        %v663 = vunpack.c.h.b16 %v358
        %v664 = vunpack.c.l.b16 %v359
        %v665 = vunpack.c.h.b16 %v359
        %v666 = vpack.c.b16 %v658, %v658
        %v667 = vpack.c.b16 %v659, %v659
        %v668 = vpack.c.b16 %v660, %v660
        %v669 = vpack.c.b16 %v661, %v661
        %v670 = vpack.c.b16 %v662, %v662
        %v671 = vpack.c.b16 %v663, %v663
        %v672 = vpack.c.b16 %v664, %v664
        %v673 = vpack.c.b16 %v665, %v665
        %v678 = vunpack.c.l.b16 %v401
        %v679 = vunpack.c.h.b16 %v401
        %v680 = vunpack.c.l.b16 %v402
        %v681 = vunpack.c.h.b16 %v402
        %v682 = vunpack.c.l.b16 %v403
        %v683 = vunpack.c.h.b16 %v403
        %v684 = vunpack.c.l.b16 %v404
        %v685 = vunpack.c.h.b16 %v404
        %v686 = vpack.c.b16 %v678, %v678
        %v687 = vpack.c.b16 %v679, %v679
        %v688 = vpack.c.b16 %v680, %v680
        %v689 = vpack.c.b16 %v681, %v681
        %v690 = vpack.c.b16 %v682, %v682
        %v691 = vpack.c.b16 %v683, %v683
        %v692 = vpack.c.b16 %v684, %v684
        %v693 = vpack.c.b16 %v685, %v685
        %v698 = vunpack.c.l.b16 %v446
        %v699 = vunpack.c.h.b16 %v446
        %v700 = vunpack.c.l.b16 %v447
        %v701 = vunpack.c.h.b16 %v447
        %v702 = vunpack.c.l.b16 %v448
        %v703 = vunpack.c.h.b16 %v448
        %v704 = vunpack.c.l.b16 %v449
        %v705 = vunpack.c.h.b16 %v449
        %v706 = vpack.c.b16 %v698, %v698
        %v707 = vpack.c.b16 %v699, %v699
        %v708 = vpack.c.b16 %v700, %v700
        %v709 = vpack.c.b16 %v701, %v701
        %v710 = vpack.c.b16 %v702, %v702
        %v711 = vpack.c.b16 %v703, %v703
        %v712 = vpack.c.b16 %v704, %v704
        %v713 = vpack.c.b16 %v705, %v705
        %v718 = vunpack.c.l.b16 %v450
        %v719 = vunpack.c.h.b16 %v450
        %v720 = vunpack.c.l.b16 %v451
        %v721 = vunpack.c.h.b16 %v451
        %v722 = vunpack.c.l.b16 %v452
        %v723 = vunpack.c.h.b16 %v452
        %v724 = vunpack.c.l.b16 %v453
        %v725 = vunpack.c.h.b16 %v453
        %v726 = vpack.c.b16 %v718, %v718
        %v727 = vpack.c.b16 %v719, %v719
        %v728 = vpack.c.b16 %v720, %v720
        %v729 = vpack.c.b16 %v721, %v721
        %v730 = vpack.c.b16 %v722, %v722
        %v731 = vpack.c.b16 %v723, %v723
        %v732 = vpack.c.b16 %v724, %v724
        %v733 = vpack.c.b16 %v725, %v725
        %v738 = vunpack.c.l.b16 %v495
        %v739 = vunpack.c.h.b16 %v495
        %v740 = vunpack.c.l.b16 %v496
        %v741 = vunpack.c.h.b16 %v496
        %v742 = vunpack.c.l.b16 %v497
        %v743 = vunpack.c.h.b16 %v497
        %v744 = vunpack.c.l.b16 %v498
        %v745 = vunpack.c.h.b16 %v498
        %v746 = vpack.c.b16 %v738, %v738
        %v747 = vpack.c.b16 %v739, %v739
        %v748 = vpack.c.b16 %v740, %v740
        %v749 = vpack.c.b16 %v741, %v741
        %v750 = vpack.c.b16 %v742, %v742
        %v751 = vpack.c.b16 %v743, %v743
        %v752 = vpack.c.b16 %v744, %v744
        %v753 = vpack.c.b16 %v745, %v745
        %v758 = vunpack.c.l.b16 %v540
        %v759 = vunpack.c.h.b16 %v540
        %v760 = vunpack.c.l.b16 %v541
        %v761 = vunpack.c.h.b16 %v541
        %v762 = vunpack.c.l.b16 %v542
        %v763 = vunpack.c.h.b16 %v542
        %v764 = vunpack.c.l.b16 %v543
        %v765 = vunpack.c.h.b16 %v543
        %v766 = vpack.c.b16 %v758, %v758
        %v767 = vpack.c.b16 %v759, %v759
        %v768 = vpack.c.b16 %v760, %v760
        %v769 = vpack.c.b16 %v761, %v761
        %v770 = vpack.c.b16 %v762, %v762
        %v771 = vpack.c.b16 %v763, %v763
        %v772 = vpack.c.b16 %v764, %v764
        %v773 = vpack.c.b16 %v765, %v765
        %v778 = vunpack.c.l.b16 %v585
        %v779 = vunpack.c.h.b16 %v585
        %v780 = vunpack.c.l.b16 %v586
        %v781 = vunpack.c.h.b16 %v586
        %v782 = vunpack.c.l.b16 %v587
        %v783 = vunpack.c.h.b16 %v587
        %v784 = vunpack.c.l.b16 %v588
        %v785 = vunpack.c.h.b16 %v588
        %v786 = vpack.c.b16 %v778, %v778
        %v787 = vpack.c.b16 %v779, %v779
        %v788 = vpack.c.b16 %v780, %v780
        %v789 = vpack.c.b16 %v781, %v781
        %v790 = vpack.c.b16 %v782, %v782
        %v791 = vpack.c.b16 %v783, %v783
        %v792 = vpack.c.b16 %v784, %v784
        %v793 = vpack.c.b16 %v785, %v785
        %v798 = vunpack.c.l.b16 %v630
        %v799 = vunpack.c.h.b16 %v630
        %v800 = vunpack.c.l.b16 %v631
        %v801 = vunpack.c.h.b16 %v631
        %v802 = vunpack.c.l.b16 %v632
        %v803 = vunpack.c.h.b16 %v632
        %v804 = vunpack.c.l.b16 %v633
        %v805 = vunpack.c.h.b16 %v633
        %v806 = vpack.c.b16 %v798, %v798
        %v807 = vpack.c.b16 %v799, %v799
        %v808 = vpack.c.b16 %v800, %v800
        %v809 = vpack.c.b16 %v801, %v801
        %v810 = vpack.c.b16 %v802, %v802
        %v811 = vpack.c.b16 %v803, %v803
        %v812 = vpack.c.b16 %v804, %v804
        %v813 = vpack.c.b16 %v805, %v805
        %vm814 = vcmask 1043456
        %v817 = vsel %vm814, %v646, %v666
        %v821 = vsel %vm814, %v647, %v667
        %v825 = vsel %vm814, %v648, %v668
        %v829 = vsel %vm814, %v649, %v669
        %v833 = vsel %vm814, %v650, %v670
        %v837 = vsel %vm814, %v651, %v671
        %v841 = vsel %vm814, %v652, %v672
        %v845 = vsel %vm814, %v653, %v673
        %v849 = vsel %vm814, %v686, %v706
        %v853 = vsel %vm814, %v687, %v707
        %v857 = vsel %vm814, %v688, %v708
        %v861 = vsel %vm814, %v689, %v709
        %v865 = vsel %vm814, %v690, %v710
        %v869 = vsel %vm814, %v691, %v711
        %v873 = vsel %vm814, %v692, %v712
        %v877 = vsel %vm814, %v693, %v713
        %v881 = vsel %vm814, %v726, %v746
        %v885 = vsel %vm814, %v727, %v747
        %v889 = vsel %vm814, %v728, %v748
        %v893 = vsel %vm814, %v729, %v749
        %v897 = vsel %vm814, %v730, %v750
        %v901 = vsel %vm814, %v731, %v751
        %v905 = vsel %vm814, %v732, %v752
        %v909 = vsel %vm814, %v733, %v753
        %v913 = vsel %vm814, %v766, %v786
        %v917 = vsel %vm814, %v767, %v787
        %v921 = vsel %vm814, %v768, %v788
        %v925 = vsel %vm814, %v769, %v789
        %v929 = vsel %vm814, %v770, %v790
        %v933 = vsel %vm814, %v771, %v791
        %v937 = vsel %vm814, %v772, %v792
        %v941 = vsel %vm814, %v773, %v793
        %v943 = vld [vmem:[%s0] sm:$0xf]
        %v944 = vld [vmem:[%s1] sm:$0xff]
        %946 = vset.pattern.permute.xlu0 0
        %947 = vperm.xlu0 %946, %v944
        %v948 = vpop.permute.xlu0 %947
        %vm950 = vcmask 588800
        %v952 = vsel %vm950, %v943, 0
        %v955 = vsel %vm814, %v806, 0
        %v958 = vsel %vm814, %v807, 0
        %v961 = vsel %vm814, %v808, 0
        %v964 = vsel %vm814, %v809, 0
        %v967 = vsel %vm814, %v810, 0
        %v970 = vsel %vm814, %v811, 0
        %v973 = vsel %vm814, %v812, 0
        %v976 = vsel %vm814, %v813, 0
        %978 = vmatpush.bf16.msra.mxu0 0
        %979 = vmatpush.bf16.msra.mxu0 0
        %980 = vmatpush.bf16.msra.mxu0 0
        %981 = vmatpush.bf16.msra.mxu0 %v955
        %982 = vmatpush.bf16.msra.mxu0 %v913
        %983 = vmatpush.bf16.msra.mxu0 %v881
        %984 = vmatpush.bf16.msra.mxu0 %v849
        %985 = vmatpush.bf16.msra.mxu0 %v817
        %986 = vmatmul.bf16.gmra.mxu0 %v952
        %v987 = vpop.f32.mrf.mxu0
        %v988 = vadd.f32 %v948, %v987
        %v989 = vpop.f32.mrf.mxu0
        %990 = vdwg.mxu0
        %991 = vmatpush.bf16.msra.mxu0 0
        %992 = vmatpush.bf16.msra.mxu0 0
        %993 = vmatpush.bf16.msra.mxu0 0
        %994 = vmatpush.bf16.msra.mxu0 %v958
        %995 = vmatpush.bf16.msra.mxu0 %v917
        %996 = vmatpush.bf16.msra.mxu0 %v885
        %997 = vmatpush.bf16.msra.mxu0 %v853
        %998 = vmatpush.bf16.msra.mxu0 %v821
        %999 = vmatmul.bf16.gmra.mxu0 %v952
        %v1000 = vpop.f32.mrf.mxu0
        %v1001 = vadd.f32 %v948, %v1000
        %v1002 = vpop.f32.mrf.mxu0
        %1003 = vdwg.mxu0
        %1004 = vmatpush.bf16.msra.mxu0 0
        %1005 = vmatpush.bf16.msra.mxu0 0
        %1006 = vmatpush.bf16.msra.mxu0 0
        %1007 = vmatpush.bf16.msra.mxu0 %v961
        %1008 = vmatpush.bf16.msra.mxu0 %v921
        %1009 = vmatpush.bf16.msra.mxu0 %v889
        %1010 = vmatpush.bf16.msra.mxu0 %v857
        %1011 = vmatpush.bf16.msra.mxu0 %v825
        %1012 = vmatmul.bf16.gmra.mxu0 %v952
        %v1013 = vpop.f32.mrf.mxu0
        %v1014 = vadd.f32 %v948, %v1013
        %v1015 = vpop.f32.mrf.mxu0
        %1016 = vdwg.mxu0
        %1017 = vmatpush.bf16.msra.mxu0 0
        %1018 = vmatpush.bf16.msra.mxu0 0
        %1019 = vmatpush.bf16.msra.mxu0 0
        %1020 = vmatpush.bf16.msra.mxu0 %v964
        %1021 = vmatpush.bf16.msra.mxu0 %v925
        %1022 = vmatpush.bf16.msra.mxu0 %v893
        %1023 = vmatpush.bf16.msra.mxu0 %v861
        %1024 = vmatpush.bf16.msra.mxu0 %v829
        %1025 = vmatmul.bf16.gmra.mxu0 %v952
        %v1026 = vpop.f32.mrf.mxu0
        %v1027 = vadd.f32 %v948, %v1026
        %v1028 = vpop.f32.mrf.mxu0
        %1029 = vdwg.mxu0
        %1030 = vmatpush.bf16.msra.mxu0 0
        %1031 = vmatpush.bf16.msra.mxu0 0
        %1032 = vmatpush.bf16.msra.mxu0 0
        %1033 = vmatpush.bf16.msra.mxu0 %v967
        %1034 = vmatpush.bf16.msra.mxu0 %v929
        %1035 = vmatpush.bf16.msra.mxu0 %v897
        %1036 = vmatpush.bf16.msra.mxu0 %v865
        %1037 = vmatpush.bf16.msra.mxu0 %v833
        %1038 = vmatmul.bf16.gmra.mxu0 %v952
        %v1039 = vpop.f32.mrf.mxu0
        %v1040 = vadd.f32 %v948, %v1039
        %v1041 = vpop.f32.mrf.mxu0
        %1042 = vdwg.mxu0
        %1043 = vmatpush.bf16.msra.mxu0 0
        %1044 = vmatpush.bf16.msra.mxu0 0
        %1045 = vmatpush.bf16.msra.mxu0 0
        %1046 = vmatpush.bf16.msra.mxu0 %v970
        %1047 = vmatpush.bf16.msra.mxu0 %v933
        %1048 = vmatpush.bf16.msra.mxu0 %v901
        %1049 = vmatpush.bf16.msra.mxu0 %v869
        %1050 = vmatpush.bf16.msra.mxu0 %v837
        %1051 = vmatmul.bf16.gmra.mxu0 %v952
        %v1052 = vpop.f32.mrf.mxu0
        %v1053 = vadd.f32 %v948, %v1052
        %v1054 = vpop.f32.mrf.mxu0
        %1055 = vdwg.mxu0
        %1056 = vmatpush.bf16.msra.mxu0 0
        %1057 = vmatpush.bf16.msra.mxu0 0
        %1058 = vmatpush.bf16.msra.mxu0 0
        %1059 = vmatpush.bf16.msra.mxu0 %v973
        %1060 = vmatpush.bf16.msra.mxu0 %v937
        %1061 = vmatpush.bf16.msra.mxu0 %v905
        %1062 = vmatpush.bf16.msra.mxu0 %v873
        %1063 = vmatpush.bf16.msra.mxu0 %v841
        %1064 = vmatmul.bf16.gmra.mxu0 %v952
        %v1065 = vpop.f32.mrf.mxu0
        %v1066 = vadd.f32 %v948, %v1065
        %v1067 = vpop.f32.mrf.mxu0
        %1068 = vdwg.mxu0
        %1069 = vmatpush.bf16.msra.mxu0 0
        %1070 = vmatpush.bf16.msra.mxu0 0
        %1071 = vmatpush.bf16.msra.mxu0 0
        %1072 = vmatpush.bf16.msra.mxu0 %v976
        %1073 = vmatpush.bf16.msra.mxu0 %v941
        %1074 = vmatpush.bf16.msra.mxu0 %v909
        %1075 = vmatpush.bf16.msra.mxu0 %v877
        %1076 = vmatpush.bf16.msra.mxu0 %v845
        %1077 = vmatmul.bf16.gmra.mxu0 %v952
        %v1078 = vpop.f32.mrf.mxu0
        %v1079 = vadd.f32 %v948, %v1078
        %v1080 = vpop.f32.mrf.mxu0
        %1081 = vdwg.mxu0
        %v1082 = vmax.f32 %v988, 0.0
        %v1083 = vmax.f32 %v1001, 0.0
        %v1084 = vmax.f32 %v1014, 0.0
        %v1085 = vmax.f32 %v1027, 0.0
        %v1086 = vmax.f32 %v1040, 0.0
        %v1087 = vmax.f32 %v1053, 0.0
        %v1088 = vmax.f32 %v1066, 0.0
        %v1089 = vmax.f32 %v1079, 0.0
        %1090 = vst [vmem:[%s232 + $0x40] sm:$0xff] %v1082
        %1091 = vst [vmem:[%s232 + $0x48] sm:$0xff] %v1083
        %1092 = vst [vmem:[%s232 + $0x50] sm:$0xff] %v1084
        %1093 = vst [vmem:[%s232 + $0x58] sm:$0xff] %v1085
        %1094 = vst [vmem:[%s232 + $0x60] sm:$0xff] %v1086
        %1095 = vst [vmem:[%s232 + $0x68] sm:$0xff] %v1087
        %1096 = vst [vmem:[%s232 + $0x70] sm:$0xff] %v1088
        %1097 = vst [vmem:[%s232 + $0x78] sm:$0xff] %v1089
        %s1098 = sand.u32 %s119, 1
        %s1099 = scalar_lea.sflag [#allocation4], %s1098
        %s1100 = sand.u32 %s119, 1
        %s1101 = smul.addr %s1100, 128
        %s1102 = scalar_lea.vmem [#allocation7], %s1101
        // Predicated region
        $region45: #{tpu_custom_call.1} parent=35 // pred_check
          %p1103 = pneg %p129
        $region46: #{tpu_custom_call.1} parent=35 // pred_check_branch
          %1105 = sbr.rel (%p1103) target = $region48
        $region47: #{tpu_custom_call.1} parent=35 // pred_region
          %s1106 = smul.u32 8, %s22
          %1108 = vsyncadd %s1099, 0
          %s1109 = smul.addr %s1106, 8
          %s1110 = scalar_lea.hbm %s4, %s1109
          %s1111 = sshll.u32 %s1102, 4
          %s1112 = int_to_ptr.vmem [resolvable:$true] %s1111
          %s1113 = sshll.u32 %s1110, 4
          %s1114 = int_to_ptr.hbm [resolvable:$true] %s1113
          %1119 = dma.vmem_to_hbm [thread:$0]  %s1112, 2048, %s1114, %s1099, 1024, 2048, 64
        $region48: #{tpu_custom_call.1} parent=35 // pred_fallthru
          _
      $region36: #{tpu_custom_call.1} parent=5 // pred_fallthru
        _
      %p1120 = scmp.le.s32.totalorder 2, %s17
      // Predicated region
      $region49: #{tpu_custom_call.1} parent=5 // pred_check
        %p1121 = pneg %p1120
      $region50: #{tpu_custom_call.1} parent=5 // pred_check_branch
        %1123 = sbr.rel (%p1121) target = $region52
      $region51: #{tpu_custom_call.1} parent=5 // pred_region
        %s1124 = ssub.s32 %s17, 2
        // Predicated region
        $region53: #{tpu_custom_call.1} parent=51 // pred_check
          %p1125 = pneg %p135
        $region54: #{tpu_custom_call.1} parent=51 // pred_check_branch
          %1127 = sbr.rel (%p1125) target = $region56
        $region55: #{tpu_custom_call.1} parent=51 // pred_region
          %s1128 = sand.u32 %s120, 1
          %s1129 = scalar_lea.sflag [#allocation4], %s1128
          %s1130 = sand.u32 %s120, 1
          %s1131 = smul.addr %s1130, 128
          %s1132 = scalar_lea.vmem [#allocation7], %s1131
          %1134 = dma.done %s1129, 2048
        $region56: #{tpu_custom_call.1} parent=51 // pred_fallthru
          _
      $region52: #{tpu_custom_call.1} parent=5 // pred_fallthru
        _
    $region6: #{tpu_custom_call.1} parent=1 // loop_footer
      %s21 = sadd.s32 1, %s17
    $region7: #{tpu_custom_call.1} parent=1 // loop_footer_branch
      %16 = sbr.rel target = $region3
    $region8: #{tpu_custom_call.1} parent=1 // loop_exit
      _
    %1135 = vsyncpa [#allocation3], 1
    %s1136 = scalar_lea.sflag [#allocation3], 1
    %1137 = vsyncpa %s1136, 1
    %1138 = vsyncpa [#allocation6], 1
    %s1139 = scalar_lea.sflag [#allocation6], 1
    %1140 = vsyncpa %s1139, 1
    %1141 = vsyncpa [#allocation4], 1
    %s1142 = scalar_lea.sflag [#allocation4], 1
    %1143 = vsyncpa %s1142, 1

</llo_original>
